<compile_context>
chip_gen: v5e
topology: v5e:2x2
jax: 0.10.0
libtpu: 0.0.40
codegen_flags: <defaults>
</compile_context>

<pallas_src>
import jax
import jax.numpy as jnp
from jax.experimental import pallas as pl
from jax.experimental.pallas import tpu as pltpu

LANE = 128          # TPU lane width
MAX_TILE_P = 64     # packed rows per grid step (64 * 128 = 8192 logical rows)


def _round_up(x, m):
    return ((x + m - 1) // m) * m


# ------------------------------- kernels ------------------------------------


def _neg_score_kernel(scal_ref,    # SMEM (3,): [w3_0, w3_1, w3_0*b1 + w3_1*b2 + b3]
                      negq_ref,    # VMEM (tile_p, 128*Q)  lane-packed neg question rows
                      negp_ref,    # VMEM (tile_p, 128*R)  lane-packed neg path rows
                      w1p_ref,     # VMEM (128*Q, 128)     block-diag replica of w1
                      w2p_ref,     # VMEM (128*R, 128)     block-diag replica of w2
                      out_ref):    # VMEM (tile_p, 128)    packed scores
    w3_0 = scal_ref[0]
    w3_1 = scal_ref[1]
    fused_b = scal_ref[2]

    # out[r, j] = dot(logical row 128*r + j, w) via one small MXU matmul (f32 acc).
    z1 = jnp.dot(negq_ref[...].astype(jnp.float32), w1p_ref[...],
                 preferred_element_type=jnp.float32)            # (tile_p, 128)
    z2 = jnp.dot(negp_ref[...].astype(jnp.float32), w2p_ref[...],
                 preferred_element_type=jnp.float32)            # (tile_p, 128)
    out_ref[...] = w3_0 * z1 + w3_1 * z2 + fused_b


def _pos_score_kernel(scal_ref,    # SMEM (3,)
                      q_ref,       # VMEM (B, Q)
                      p_ref,       # VMEM (B, R)
                      w1_ref,      # VMEM (1, Q)
                      w2_ref,      # VMEM (1, R)
                      out_ref):    # VMEM (B, 1)
    w3_0 = scal_ref[0]
    w3_1 = scal_ref[1]
    fused_b = scal_ref[2]
    z1 = jnp.sum(q_ref[...].astype(jnp.float32) * w1_ref[...].astype(jnp.float32),
                 axis=-1, keepdims=True)                        # (B, 1)
    z2 = jnp.sum(p_ref[...].astype(jnp.float32) * w2_ref[...].astype(jnp.float32),
                 axis=-1, keepdims=True)                        # (B, 1)
    out_ref[...] = w3_0 * z1 + w3_1 * z2 + fused_b


# ------------------------------- wrapper ------------------------------------


def init_params(key, max_question_word, max_relortype_word):
    """Deterministic synthetic init mirroring nn.Linear parameter shapes."""
    k1, k2, k3, k4, k5, k6 = jax.random.split(key, 6)
    w1 = jax.random.normal(k1, (1, max_question_word), jnp.float32) * 0.1
    b1 = jax.random.normal(k2, (1,), jnp.float32) * 0.1
    w2 = jax.random.normal(k3, (1, max_relortype_word), jnp.float32) * 0.1
    b2 = jax.random.normal(k4, (1,), jnp.float32) * 0.1
    w3 = jax.random.normal(k5, (1, 2), jnp.float32) * 0.1
    b3 = jax.random.normal(k6, (1,), jnp.float32) * 0.1
    return (w1, b1, w2, b2, w3, b3)


def path_ranking_forward(params, batch):
    """batch = (pos_q, pos_p, pos_len, neg_q, neg_p, neg_len) like the module."""
    pos_q, pos_p, _pos_len, neg_q, neg_p, neg_len = batch
    w1, b1, w2, b2, w3, b3 = params

    B, Q = pos_q.shape
    _, N, R = neg_p.shape
    assert neg_q.shape == (B, N, Q)
    assert neg_len.shape[0] == B and neg_len.shape[1] == N  # only sizes used

    f32 = jnp.float32
    w1 = w1.astype(f32)
    w2 = w2.astype(f32)
    w3_0 = w3[0, 0].astype(f32)
    w3_1 = w3[0, 1].astype(f32)
    fused_b = w3_0 * b1[0].astype(f32) + w3_1 * b2[0].astype(f32) + b3[0].astype(f32)
    scalars = jnp.stack([w3_0, w3_1, fused_b])              # (3,) -> SMEM

    # ---- negative paths: flatten + lane-pack (row-major, copy-free reshape) ----
    BN = B * N
    packed_needed = _round_up(max(BN, 1), LANE) // LANE     # ceil(BN / 128)
    packed_needed = _round_up(packed_needed, 8)             # sublane-aligned tiles
    if packed_needed <= MAX_TILE_P:
        tile_p = packed_needed
        packed_rows = packed_needed
    else:
        tile_p = MAX_TILE_P
        packed_rows = _round_up(packed_needed, MAX_TILE_P)
    BN_pad = packed_rows * LANE
    num_tiles = packed_rows // tile_p

    neg_q_flat = neg_q.reshape(BN, Q)
    neg_p_flat = neg_p.reshape(BN, R)
    if BN_pad != BN:
        # TODO(synk): this pad copies the negative inputs once; production shapes
        # should make B*N a multiple of 128*tile_p so packing stays a pure reshape.
        neg_q_flat = jnp.pad(neg_q_flat, ((0, BN_pad - BN), (0, 0)))
        neg_p_flat = jnp.pad(neg_p_flat, ((0, BN_pad - BN), (0, 0)))
    negq_packed = neg_q_flat.reshape(packed_rows, LANE * Q)
    negp_packed = neg_p_flat.reshape(packed_rows, LANE * R)

    # Block-diagonal weight replicas: W[k*Q + q, j] = w1[q] * (k == j).
    w1p = jnp.kron(jnp.eye(LANE, dtype=f32), w1.reshape(Q, 1))   # (128*Q, 128)
    w2p = jnp.kron(jnp.eye(LANE, dtype=f32), w2.reshape(R, 1))   # (128*R, 128)

    neg_packed_scores = pl.pallas_call(
        _neg_score_kernel,
        out_shape=jax.ShapeDtypeStruct((packed_rows, LANE), f32),
        grid=(num_tiles,),
        in_specs=[
            pl.BlockSpec(memory_space=pltpu.MemorySpace.SMEM),       # scalars
            pl.BlockSpec((tile_p, LANE * Q), lambda i: (i, 0)),      # packed neg_q
            pl.BlockSpec((tile_p, LANE * R), lambda i: (i, 0)),      # packed neg_p
            pl.BlockSpec((LANE * Q, LANE), lambda i: (0, 0)),        # w1p (resident)
            pl.BlockSpec((LANE * R, LANE), lambda i: (0, 0)),        # w2p (resident)
        ],
        out_specs=pl.BlockSpec((tile_p, LANE), lambda i: (i, 0)),
        compiler_params=pltpu.CompilerParams(
            dimension_semantics=("parallel",)),
    )(scalars, negq_packed, negp_packed, w1p, w2p)

    neg_score = neg_packed_scores.reshape(-1)[:BN].reshape(B, N)

    # ---- positive path: computed once; expand(B, N) done in the wrapper ----
    pos_col = pl.pallas_call(
        _pos_score_kernel,
        out_shape=jax.ShapeDtypeStruct((B, 1), f32),
        in_specs=[
            pl.BlockSpec(memory_space=pltpu.MemorySpace.SMEM),
            pl.BlockSpec(memory_space=pltpu.MemorySpace.VMEM),
            pl.BlockSpec(memory_space=pltpu.MemorySpace.VMEM),
            pl.BlockSpec(memory_space=pltpu.MemorySpace.VMEM),
            pl.BlockSpec(memory_space=pltpu.MemorySpace.VMEM),
        ],
        out_specs=pl.BlockSpec(memory_space=pltpu.MemorySpace.VMEM),
    )(scalars, pos_q, pos_p, w1, w2)
    pos_score = jnp.broadcast_to(pos_col, (B, N))

    return pos_score, neg_score


def path_ranking_reference(params, batch):
    """Pure-JAX mirror of the PyTorch forward for verification."""
    pos_q, pos_p, _pos_len, neg_q, neg_p, _neg_len = batch
    w1, b1, w2, b2, w3, b3 = params
    B = pos_q.shape[0]
    N = neg_p.shape[1]

    pos_z1 = pos_q @ w1[0] + b1[0]
    pos_z2 = pos_p @ w2[0] + b2[0]
    pos_score = w3[0, 0] * pos_z1 + w3[0, 1] * pos_z2 + b3[0]
    pos_score = jnp.broadcast_to(pos_score[:, None], (B, N))

    neg_z1 = jnp.einsum("bnq,q->bn", neg_q, w1[0]) + b1[0]
    neg_z2 = jnp.einsum("bnr,r->bn", neg_p, w2[0]) + b2[0]
    neg_score = w3[0, 0] * neg_z1 + w3[0, 1] * neg_z2 + b3[0]
    return pos_score, neg_score


if __name__ == "__main__":
    # B = batch, N = neg_size, Q = max_question_word, R = max_relortype_word
    B, N, Q, R = 4, 5, 16, 8

    key = jax.random.PRNGKey(0)
    kp, kd = jax.random.split(key)

    def snap(x):
        # Snap test data to the bf16 grid so the kernel's MXU matmul and the XLA
        # reference agree to f32-accumulation accuracy regardless of the
        # backend's default matmul precision.
        return x.astype(jnp.bfloat16).astype(jnp.float32)

    params = tuple(snap(p) for p in init_params(kp, Q, R))

    k1, k2, k3, k4 = jax.random.split(kd, 4)
    pos_q = snap(jax.random.normal(k1, (B, Q), jnp.float32))
    pos_p = snap(jax.random.normal(k2, (B, R), jnp.float32))
    pos_len = jnp.ones((B,), jnp.float32)            # unused (only sizes matter)
    neg_q = snap(jax.random.normal(k3, (B, N, Q), jnp.float32))
    neg_p = snap(jax.random.normal(k4, (B, N, R), jnp.float32))
    neg_len = jnp.ones((B, N), jnp.float32)          # only its shape is used

    batch = (pos_q, pos_p, pos_len, neg_q, neg_p, neg_len)

    pos_score, neg_score = path_ranking_forward(params, batch)
    jax.block_until_ready((pos_score, neg_score))

    ref_pos, ref_neg = path_ranking_reference(params, batch)
    assert pos_score.shape == (B, N) and neg_score.shape == (B, N)
    assert jnp.allclose(pos_score, ref_pos, atol=1e-5, rtol=1e-5)
    assert jnp.allclose(neg_score, ref_neg, atol=1e-5, rtol=1e-5)

    print("KERNEL_OK")
</pallas_src>

<mosaic_0001>
module attributes {stable_mosaic.version = 11 : i64} {
  func.func @_neg_score_kernel(%arg0: i32, %arg1: memref<3xf32, #tpu.memory_space<smem>>, %arg2: memref<8x2048xf32, #tpu.memory_space<vmem>>, %arg3: memref<8x1024xf32, #tpu.memory_space<vmem>>, %arg4: memref<2048x128xf32, #tpu.memory_space<vmem>>, %arg5: memref<1024x128xf32, #tpu.memory_space<vmem>>, %arg6: memref<8x128xf32, #tpu.memory_space<vmem>>) attributes {dimension_semantics = [#tpu.dimension_semantics<parallel>], iteration_bounds = array<i64: 1>, scalar_prefetch = 0 : i64, scratch_operands = 0 : i64, tpu.core_type = #tpu.core_type<tc>, window_params = [{transform_indices = @transform_0, window_bounds = array<i64: 3>}, {transform_indices = @transform_1, window_bounds = array<i64: 8, 2048>}, {transform_indices = @transform_2, window_bounds = array<i64: 8, 1024>}, {pipeline_mode = #tpu.pipeline_mode<synchronous>, transform_indices = @transform_3, window_bounds = array<i64: 2048, 128>}, {pipeline_mode = #tpu.pipeline_mode<synchronous>, transform_indices = @transform_4, window_bounds = array<i64: 1024, 128>}, {transform_indices = @transform_5, window_bounds = array<i64: 8, 128>}]} {
    %c0 = arith.constant 0 : index
    %0 = memref.load %arg1[%c0] : memref<3xf32, #tpu.memory_space<smem>>
    %c1 = arith.constant 1 : index
    %1 = memref.load %arg1[%c1] : memref<3xf32, #tpu.memory_space<smem>>
    %c2 = arith.constant 2 : index
    %2 = memref.load %arg1[%c2] : memref<3xf32, #tpu.memory_space<smem>>
    %c0_0 = arith.constant 0 : index
    %c0_1 = arith.constant 0 : index
    %3 = vector.load %arg2[%c0_0, %c0_1] : memref<8x2048xf32, #tpu.memory_space<vmem>>, vector<8x2048xf32>
    %c0_2 = arith.constant 0 : index
    %c0_3 = arith.constant 0 : index
    %4 = vector.load %arg4[%c0_2, %c0_3] : memref<2048x128xf32, #tpu.memory_space<vmem>>, vector<2048x128xf32>
    %cst = arith.constant dense<0.000000e+00> : vector<8x128xf32>
    %5 = tpu.matmul %3, %4, %cst {dimension_numbers = #tpu.dot_dimension_numbers<[1], [0], [0], [1], [0, 0, 1, 1], [], []>} : vector<8x2048xf32>, vector<2048x128xf32>, vector<8x128xf32> -> vector<8x128xf32>
    %c0_4 = arith.constant 0 : index
    %c0_5 = arith.constant 0 : index
    %6 = vector.load %arg3[%c0_4, %c0_5] : memref<8x1024xf32, #tpu.memory_space<vmem>>, vector<8x1024xf32>
    %c0_6 = arith.constant 0 : index
    %c0_7 = arith.constant 0 : index
    %7 = vector.load %arg5[%c0_6, %c0_7] : memref<1024x128xf32, #tpu.memory_space<vmem>>, vector<1024x128xf32>
    %cst_8 = arith.constant dense<0.000000e+00> : vector<8x128xf32>
    %8 = tpu.matmul %6, %7, %cst_8 {dimension_numbers = #tpu.dot_dimension_numbers<[1], [0], [0], [1], [0, 0, 1, 1], [], []>} : vector<8x1024xf32>, vector<1024x128xf32>, vector<8x128xf32> -> vector<8x128xf32>
    %9 = vector.broadcast %0 : f32 to vector<8x128xf32>
    %10 = arith.mulf %9, %5 : vector<8x128xf32>
    %11 = vector.broadcast %1 : f32 to vector<8x128xf32>
    %12 = arith.mulf %11, %8 : vector<8x128xf32>
    %13 = arith.addf %10, %12 : vector<8x128xf32>
    %14 = vector.broadcast %2 : f32 to vector<8x128xf32>
    %15 = arith.addf %13, %14 : vector<8x128xf32>
    %c0_9 = arith.constant 0 : index
    %c0_10 = arith.constant 0 : index
    %16 = vector.load %arg6[%c0_9, %c0_10] : memref<8x128xf32, #tpu.memory_space<vmem>>, vector<8x128xf32>
    tpu.vector_store %arg6[%c0_9, %c0_10], %15 {strides = array<i32>} : memref<8x128xf32, #tpu.memory_space<vmem>>, vector<8x128xf32>,
    return
  }
  func.func @transform_0(%arg0: i32) -> i32 {
    %c0_i32 = arith.constant 0 : i32
    %c0_i32_0 = arith.constant 0 : i32
    return %c0_i32 : i32
  }
  func.func @transform_1(%arg0: i32) -> (i32, i32) {
    %c0_i32 = arith.constant 0 : i32
    %c0_i32_0 = arith.constant 0 : i32
    return %arg0, %c0_i32 : i32, i32
  }
  func.func @transform_2(%arg0: i32) -> (i32, i32) {
    %c0_i32 = arith.constant 0 : i32
    %c0_i32_0 = arith.constant 0 : i32
    return %arg0, %c0_i32 : i32, i32
  }
  func.func @transform_3(%arg0: i32) -> (i32, i32) {
    %c0_i32 = arith.constant 0 : i32
    %c0_i32_0 = arith.constant 0 : i32
    %c0_i32_1 = arith.constant 0 : i32
    return %c0_i32, %c0_i32_0 : i32, i32
  }
  func.func @transform_4(%arg0: i32) -> (i32, i32) {
    %c0_i32 = arith.constant 0 : i32
    %c0_i32_0 = arith.constant 0 : i32
    %c0_i32_1 = arith.constant 0 : i32
    return %c0_i32, %c0_i32_0 : i32, i32
  }
  func.func @transform_5(%arg0: i32) -> (i32, i32) {
    %c0_i32 = arith.constant 0 : i32
    %c0_i32_0 = arith.constant 0 : i32
    return %arg0, %c0_i32 : i32, i32
  }
}

</mosaic_0001>

<llo_original>
// kernel: tpu_custom_call.1
$region0: #{tpu_custom_call.1}
  #allocation0 [shape = 'u32[]', space=smem, size = 0x4, offset = 0x4, fixed_abs, tag = 'smem constant byte address 0x4 - core index']
  #allocation1 [shape = 'u32[72,128]{1,0:T(1,128)}', space=vmem, size = 0x9000, scoped, tag = 'internal scratch']
  %s0 = inlined_call_operand.hbm [shape: f32[3], index: 0, kind: input, shape index: {}]
  %s1 = inlined_call_operand.hbm [shape: f32[8,2048], index: 1, kind: input, shape index: {}]
  %s2 = inlined_call_operand.hbm [shape: f32[8,1024], index: 2, kind: input, shape index: {}]
  %s3 = inlined_call_operand.hbm [shape: f32[2048,128], index: 3, kind: input, shape index: {}]
  %s4 = inlined_call_operand.hbm [shape: f32[1024,128], index: 4, kind: input, shape index: {}]
  %s5 = inlined_call_operand.hbm [shape: f32[8,128], index: 5, kind: output, shape index: {}]
  %s6 = sld [smem:[#allocation0]]
  $region50: #{tpu_custom_call.1} parent=0
    _
  %s8 = ssub.s32 1, %s6
  %s9 = scalar_select 0, %s8, %s6
  $region1: #{tpu_custom_call.1} parent=0
    #allocation2 [shape = 'u8[512]{0}', space=smem, size = 0x200, scoped, tag = 'input window, operand 0, single buffered']
    #allocation3 [shape = 's32[1]{0}', space=sflag, size = 0x4, scoped, tag = 'scoped memory for tpu_custom_call.1']
    #allocation4 [shape = 's32[1]{0}', space=sflag, size = 0x4, scoped, tag = 'scoped memory for tpu_custom_call.1']
    #allocation5 [shape = 's32[1]{0}', space=sflag, size = 0x4, scoped, tag = 'scoped memory for tpu_custom_call.1']
    #allocation6 [shape = 'u8[65536]{0}', space=vmem, size = 0x10000, scoped, tag = 'input window, operand 1, single buffered']
    #allocation7 [shape = 'u8[32768]{0}', space=vmem, size = 0x8000, scoped, tag = 'input window, operand 2, single buffered']
    #allocation8 [shape = 's32[1]{0}', space=sflag, size = 0x4, scoped, tag = 'scoped memory for tpu_custom_call.1']
    #allocation9 [shape = 'u8[1048576]{0}', space=vmem, size = 0x100000, scoped, tag = 'input window, operand 3, single buffered']
    #allocation10 [shape = 'u8[524288]{0}', space=vmem, size = 0x80000, scoped, tag = 'input window, operand 4, single buffered']
    #allocation11 [shape = 's32[1]{0}', space=sflag, size = 0x4, scoped, tag = 'scoped memory for tpu_custom_call.1']
    #allocation12 [shape = 'u8[4096]{0}', space=vmem, size = 0x1000, scoped, tag = 'output window, operand 0, single buffered']
    %10 = vsyncpa [#allocation5], 0
    %11 = vsyncpa [#allocation3], 0
    %12 = vsyncpa [#allocation8], 0
    %13 = vsyncpa [#allocation11], 0
    %14 = vsyncpa [#allocation4], 0
    // Predicated region
    $region2: #{tpu_custom_call.1} parent=1 // pred_check
      _
    $region3: #{tpu_custom_call.1} parent=1 // pred_check_branch
      %16 = sbr.rel (0) target = $region5
    $region4: #{tpu_custom_call.1} parent=1 // pred_region
      %18 = vsyncadd [#allocation5], 0
      %s20 = sshll.u32 %s0, 4
      %s21 = int_to_ptr.hbm [resolvable:$true] %s20
      %23 = dma.hbm_to_smem %s21, 16, [#allocation2], [#allocation5]
    $region5: #{tpu_custom_call.1} parent=1 // pred_fallthru
      _
    // Predicated region
    $region6: #{tpu_custom_call.1} parent=1 // pred_check
      _
    $region7: #{tpu_custom_call.1} parent=1 // pred_check_branch
      %25 = sbr.rel (0) target = $region9
    $region8: #{tpu_custom_call.1} parent=1 // pred_region
      %27 = vsyncadd [#allocation3], 0
      %s29 = sshll.u32 %s1, 4
      %s30 = int_to_ptr.hbm [resolvable:$true] %s29
      %s31 = sshll.u32 [#allocation6], 4
      %s32 = int_to_ptr.vmem [resolvable:$true] %s31
      %34 = dma.hbm_to_vmem [thread:$0]  %s30, 2048, %s32, [#allocation3]
    $region9: #{tpu_custom_call.1} parent=1 // pred_fallthru
      _
    // Predicated region
    $region10: #{tpu_custom_call.1} parent=1 // pred_check
      _
    $region11: #{tpu_custom_call.1} parent=1 // pred_check_branch
      %36 = sbr.rel (0) target = $region13
    $region12: #{tpu_custom_call.1} parent=1 // pred_region
      %38 = vsyncadd [#allocation8], 0
      %s40 = sshll.u32 %s2, 4
      %s41 = int_to_ptr.hbm [resolvable:$true] %s40
      %s42 = sshll.u32 [#allocation7], 4
      %s43 = int_to_ptr.vmem [resolvable:$true] %s42
      %45 = dma.hbm_to_vmem [thread:$0]  %s41, 1024, %s43, [#allocation8]
    $region13: #{tpu_custom_call.1} parent=1 // pred_fallthru
      _
    // Predicated region
    $region14: #{tpu_custom_call.1} parent=1 // pred_check
      _
    $region15: #{tpu_custom_call.1} parent=1 // pred_check_branch
      %47 = sbr.rel (0) target = $region17
    $region16: #{tpu_custom_call.1} parent=1 // pred_region
      %49 = vsyncadd [#allocation8], 0
      %s50 = sshll.u32 %s3, 4
      %s51 = int_to_ptr.hbm [resolvable:$true] %s50
      %s52 = sshll.u32 [#allocation9], 4
      %s53 = int_to_ptr.vmem [resolvable:$true] %s52
      %58 = dma.hbm_to_vmem [thread:$0]  %s51, 32768, %s53, [#allocation8], 128, 128, 8
    $region17: #{tpu_custom_call.1} parent=1 // pred_fallthru
      _
    // Predicated region
    $region18: #{tpu_custom_call.1} parent=1 // pred_check
      _
    $region19: #{tpu_custom_call.1} parent=1 // pred_check_branch
      %60 = sbr.rel (0) target = $region21
    $region20: #{tpu_custom_call.1} parent=1 // pred_region
      %62 = vsyncadd [#allocation11], 0
      %s63 = sshll.u32 %s4, 4
      %s64 = int_to_ptr.hbm [resolvable:$true] %s63
      %s65 = sshll.u32 [#allocation10], 4
      %s66 = int_to_ptr.vmem [resolvable:$true] %s65
      %71 = dma.hbm_to_vmem [thread:$0]  %s64, 16384, %s66, [#allocation11], 128, 128, 8
    $region21: #{tpu_custom_call.1} parent=1 // pred_fallthru
      _
    // Predicated region
    $region22: #{tpu_custom_call.1} parent=1 // pred_check
      _
    $region23: #{tpu_custom_call.1} parent=1 // pred_check_branch
      %73 = sbr.rel (0) target = $region25
    $region24: #{tpu_custom_call.1} parent=1 // pred_region
      %75 = dma.done [#allocation5], 16
    $region25: #{tpu_custom_call.1} parent=1 // pred_fallthru
      _
    // Predicated region
    $region26: #{tpu_custom_call.1} parent=1 // pred_check
      _
    $region27: #{tpu_custom_call.1} parent=1 // pred_check_branch
      %77 = sbr.rel (0) target = $region29
    $region28: #{tpu_custom_call.1} parent=1 // pred_region
      %79 = dma.done [#allocation3], 2048
    $region29: #{tpu_custom_call.1} parent=1 // pred_fallthru
      _
    // Predicated region
    $region30: #{tpu_custom_call.1} parent=1 // pred_check
      _
    $region31: #{tpu_custom_call.1} parent=1 // pred_check_branch
      %81 = sbr.rel (0) target = $region33
    $region32: #{tpu_custom_call.1} parent=1 // pred_region
      %83 = dma.done [#allocation8], 1024
    $region33: #{tpu_custom_call.1} parent=1 // pred_fallthru
      _
    // Predicated region
    $region34: #{tpu_custom_call.1} parent=1 // pred_check
      _
    $region35: #{tpu_custom_call.1} parent=1 // pred_check_branch
      %85 = sbr.rel (0) target = $region37
    $region36: #{tpu_custom_call.1} parent=1 // pred_region
      %87 = dma.done [#allocation8], 32768
    $region37: #{tpu_custom_call.1} parent=1 // pred_fallthru
      _
    // Predicated region
    $region38: #{tpu_custom_call.1} parent=1 // pred_check
      _
    $region39: #{tpu_custom_call.1} parent=1 // pred_check_branch
      %89 = sbr.rel (0) target = $region41
    $region40: #{tpu_custom_call.1} parent=1 // pred_region
      %91 = dma.done [#allocation11], 16384
    $region41: #{tpu_custom_call.1} parent=1 // pred_fallthru
      _
    %92 = sfence
    %s93 = sld [smem:[#allocation2]]
    %s94 = sld [smem:[#allocation2 + $0x1]]
    %s95 = sld [smem:[#allocation2 + $0x2]]
    %v96 = vld [vmem:[#allocation6] sm:$0xff]
    %v97 = vld [vmem:[#allocation6 + $0x8] sm:$0xff]
    %v98 = vld [vmem:[#allocation6 + $0x10] sm:$0xff]
    %v99 = vld [vmem:[#allocation6 + $0x18] sm:$0xff]
    %v100 = vld [vmem:[#allocation6 + $0x20] sm:$0xff]
    %v101 = vld [vmem:[#allocation6 + $0x28] sm:$0xff]
    %v102 = vld [vmem:[#allocation6 + $0x30] sm:$0xff]
    %v103 = vld [vmem:[#allocation6 + $0x38] sm:$0xff]
    %v104 = vld [vmem:[#allocation6 + $0x40] sm:$0xff]
    %v105 = vld [vmem:[#allocation6 + $0x48] sm:$0xff]
    %v106 = vld [vmem:[#allocation6 + $0x50] sm:$0xff]
    %v107 = vld [vmem:[#allocation6 + $0x58] sm:$0xff]
    %v108 = vld [vmem:[#allocation6 + $0x60] sm:$0xff]
    %v109 = vld [vmem:[#allocation6 + $0x68] sm:$0xff]
    %v110 = vld [vmem:[#allocation6 + $0x70] sm:$0xff]
    %v111 = vld [vmem:[#allocation6 + $0x78] sm:$0xff]
    %v112 = vld [vmem:[#allocation9] sm:$0xff]
    %v113 = vld [vmem:[#allocation9 + $0x8] sm:$0xff]
    %v114 = vld [vmem:[#allocation9 + $0x10] sm:$0xff]
    %v115 = vld [vmem:[#allocation9 + $0x18] sm:$0xff]
    %v116 = vld [vmem:[#allocation9 + $0x20] sm:$0xff]
    %v117 = vld [vmem:[#allocation9 + $0x28] sm:$0xff]
    %v118 = vld [vmem:[#allocation9 + $0x30] sm:$0xff]
    %v119 = vld [vmem:[#allocation9 + $0x38] sm:$0xff]
    %v120 = vld [vmem:[#allocation9 + $0x40] sm:$0xff]
    %v121 = vld [vmem:[#allocation9 + $0x48] sm:$0xff]
    %v122 = vld [vmem:[#allocation9 + $0x50] sm:$0xff]
    %v123 = vld [vmem:[#allocation9 + $0x58] sm:$0xff]
    %v124 = vld [vmem:[#allocation9 + $0x60] sm:$0xff]
    %v125 = vld [vmem:[#allocation9 + $0x68] sm:$0xff]
    %v126 = vld [vmem:[#allocation9 + $0x70] sm:$0xff]
    %v127 = vld [vmem:[#allocation9 + $0x78] sm:$0xff]
    %v128 = vld [vmem:[#allocation9 + $0x80] sm:$0xff]
    %v129 = vld [vmem:[#allocation9 + $0x88] sm:$0xff]
    %v130 = vld [vmem:[#allocation9 + $0x90] sm:$0xff]
    %v131 = vld [vmem:[#allocation9 + $0x98] sm:$0xff]
    %v132 = vld [vmem:[#allocation9 + $0xa0] sm:$0xff]
    %v133 = vld [vmem:[#allocation9 + $0xa8] sm:$0xff]
    %v134 = vld [vmem:[#allocation9 + $0xb0] sm:$0xff]
    %v135 = vld [vmem:[#allocation9 + $0xb8] sm:$0xff]
    %v136 = vld [vmem:[#allocation9 + $0xc0] sm:$0xff]
    %v137 = vld [vmem:[#allocation9 + $0xc8] sm:$0xff]
    %v138 = vld [vmem:[#allocation9 + $0xd0] sm:$0xff]
    %v139 = vld [vmem:[#allocation9 + $0xd8] sm:$0xff]
    %v140 = vld [vmem:[#allocation9 + $0xe0] sm:$0xff]
    %v141 = vld [vmem:[#allocation9 + $0xe8] sm:$0xff]
    %v142 = vld [vmem:[#allocation9 + $0xf0] sm:$0xff]
    %v143 = vld [vmem:[#allocation9 + $0xf8] sm:$0xff]
    %v144 = vld [vmem:[#allocation9 + $0x100] sm:$0xff]
    %v145 = vld [vmem:[#allocation9 + $0x108] sm:$0xff]
    %v146 = vld [vmem:[#allocation9 + $0x110] sm:$0xff]
    %v147 = vld [vmem:[#allocation9 + $0x118] sm:$0xff]
    %v148 = vld [vmem:[#allocation9 + $0x120] sm:$0xff]
    %v149 = vld [vmem:[#allocation9 + $0x128] sm:$0xff]
    %v150 = vld [vmem:[#allocation9 + $0x130] sm:$0xff]
    %v151 = vld [vmem:[#allocation9 + $0x138] sm:$0xff]
    %v152 = vld [vmem:[#allocation9 + $0x140] sm:$0xff]
    %v153 = vld [vmem:[#allocation9 + $0x148] sm:$0xff]
    %v154 = vld [vmem:[#allocation9 + $0x150] sm:$0xff]
    %v155 = vld [vmem:[#allocation9 + $0x158] sm:$0xff]
    %v156 = vld [vmem:[#allocation9 + $0x160] sm:$0xff]
    %v157 = vld [vmem:[#allocation9 + $0x168] sm:$0xff]
    %v158 = vld [vmem:[#allocation9 + $0x170] sm:$0xff]
    %v159 = vld [vmem:[#allocation9 + $0x178] sm:$0xff]
    %v160 = vld [vmem:[#allocation9 + $0x180] sm:$0xff]
    %v161 = vld [vmem:[#allocation9 + $0x188] sm:$0xff]
    %v162 = vld [vmem:[#allocation9 + $0x190] sm:$0xff]
    %v163 = vld [vmem:[#allocation9 + $0x198] sm:$0xff]
    %v164 = vld [vmem:[#allocation9 + $0x1a0] sm:$0xff]
    %v165 = vld [vmem:[#allocation9 + $0x1a8] sm:$0xff]
    %v166 = vld [vmem:[#allocation9 + $0x1b0] sm:$0xff]
    %v167 = vld [vmem:[#allocation9 + $0x1b8] sm:$0xff]
    %v168 = vld [vmem:[#allocation9 + $0x1c0] sm:$0xff]
    %v169 = vld [vmem:[#allocation9 + $0x1c8] sm:$0xff]
    %v170 = vld [vmem:[#allocation9 + $0x1d0] sm:$0xff]
    %v171 = vld [vmem:[#allocation9 + $0x1d8] sm:$0xff]
    %v172 = vld [vmem:[#allocation9 + $0x1e0] sm:$0xff]
    %v173 = vld [vmem:[#allocation9 + $0x1e8] sm:$0xff]
    %v174 = vld [vmem:[#allocation9 + $0x1f0] sm:$0xff]
    %v175 = vld [vmem:[#allocation9 + $0x1f8] sm:$0xff]
    %v176 = vld [vmem:[#allocation9 + $0x200] sm:$0xff]
    %v177 = vld [vmem:[#allocation9 + $0x208] sm:$0xff]
    %v178 = vld [vmem:[#allocation9 + $0x210] sm:$0xff]
    %v179 = vld [vmem:[#allocation9 + $0x218] sm:$0xff]
    %v180 = vld [vmem:[#allocation9 + $0x220] sm:$0xff]
    %v181 = vld [vmem:[#allocation9 + $0x228] sm:$0xff]
    %v182 = vld [vmem:[#allocation9 + $0x230] sm:$0xff]
    %v183 = vld [vmem:[#allocation9 + $0x238] sm:$0xff]
    %v184 = vld [vmem:[#allocation9 + $0x240] sm:$0xff]
    %v185 = vld [vmem:[#allocation9 + $0x248] sm:$0xff]
    %v186 = vld [vmem:[#allocation9 + $0x250] sm:$0xff]
    %v187 = vld [vmem:[#allocation9 + $0x258] sm:$0xff]
    %v188 = vld [vmem:[#allocation9 + $0x260] sm:$0xff]
    %v189 = vld [vmem:[#allocation9 + $0x268] sm:$0xff]
    %v190 = vld [vmem:[#allocation9 + $0x270] sm:$0xff]
    %v191 = vld [vmem:[#allocation9 + $0x278] sm:$0xff]
    %v192 = vld [vmem:[#allocation9 + $0x280] sm:$0xff]
    %v193 = vld [vmem:[#allocation9 + $0x288] sm:$0xff]
    %v194 = vld [vmem:[#allocation9 + $0x290] sm:$0xff]
    %v195 = vld [vmem:[#allocation9 + $0x298] sm:$0xff]
    %v196 = vld [vmem:[#allocation9 + $0x2a0] sm:$0xff]
    %v197 = vld [vmem:[#allocation9 + $0x2a8] sm:$0xff]
    %v198 = vld [vmem:[#allocation9 + $0x2b0] sm:$0xff]
    %v199 = vld [vmem:[#allocation9 + $0x2b8] sm:$0xff]
    %v200 = vld [vmem:[#allocation9 + $0x2c0] sm:$0xff]
    %v201 = vld [vmem:[#allocation9 + $0x2c8] sm:$0xff]
    %v202 = vld [vmem:[#allocation9 + $0x2d0] sm:$0xff]
    %v203 = vld [vmem:[#allocation9 + $0x2d8] sm:$0xff]
    %v204 = vld [vmem:[#allocation9 + $0x2e0] sm:$0xff]
    %v205 = vld [vmem:[#allocation9 + $0x2e8] sm:$0xff]
    %v206 = vld [vmem:[#allocation9 + $0x2f0] sm:$0xff]
    %v207 = vld [vmem:[#allocation9 + $0x2f8] sm:$0xff]
    %v208 = vld [vmem:[#allocation9 + $0x300] sm:$0xff]
    %v209 = vld [vmem:[#allocation9 + $0x308] sm:$0xff]
    %v210 = vld [vmem:[#allocation9 + $0x310] sm:$0xff]
    %v211 = vld [vmem:[#allocation9 + $0x318] sm:$0xff]
    %v212 = vld [vmem:[#allocation9 + $0x320] sm:$0xff]
    %v213 = vld [vmem:[#allocation9 + $0x328] sm:$0xff]
    %v214 = vld [vmem:[#allocation9 + $0x330] sm:$0xff]
    %v215 = vld [vmem:[#allocation9 + $0x338] sm:$0xff]
    %v216 = vld [vmem:[#allocation9 + $0x340] sm:$0xff]
    %v217 = vld [vmem:[#allocation9 + $0x348] sm:$0xff]
    %v218 = vld [vmem:[#allocation9 + $0x350] sm:$0xff]
    %v219 = vld [vmem:[#allocation9 + $0x358] sm:$0xff]
    %v220 = vld [vmem:[#allocation9 + $0x360] sm:$0xff]
    %v221 = vld [vmem:[#allocation9 + $0x368] sm:$0xff]
    %v222 = vld [vmem:[#allocation9 + $0x370] sm:$0xff]
    %v223 = vld [vmem:[#allocation9 + $0x378] sm:$0xff]
    %v224 = vld [vmem:[#allocation9 + $0x380] sm:$0xff]
    %v225 = vld [vmem:[#allocation9 + $0x388] sm:$0xff]
    %v226 = vld [vmem:[#allocation9 + $0x390] sm:$0xff]
    %v227 = vld [vmem:[#allocation9 + $0x398] sm:$0xff]
    %v228 = vld [vmem:[#allocation9 + $0x3a0] sm:$0xff]
    %v229 = vld [vmem:[#allocation9 + $0x3a8] sm:$0xff]
    %v230 = vld [vmem:[#allocation9 + $0x3b0] sm:$0xff]
    %v231 = vld [vmem:[#allocation9 + $0x3b8] sm:$0xff]
    %v232 = vld [vmem:[#allocation9 + $0x3c0] sm:$0xff]
    %v233 = vld [vmem:[#allocation9 + $0x3c8] sm:$0xff]
    %v234 = vld [vmem:[#allocation9 + $0x3d0] sm:$0xff]
    %v235 = vld [vmem:[#allocation9 + $0x3d8] sm:$0xff]
    %v236 = vld [vmem:[#allocation9 + $0x3e0] sm:$0xff]
    %v237 = vld [vmem:[#allocation9 + $0x3e8] sm:$0xff]
    %v238 = vld [vmem:[#allocation9 + $0x3f0] sm:$0xff]
    %v239 = vld [vmem:[#allocation9 + $0x3f8] sm:$0xff]
    %v240 = vld [vmem:[#allocation9 + $0x400] sm:$0xff]
    %v241 = vld [vmem:[#allocation9 + $0x408] sm:$0xff]
    %v242 = vld [vmem:[#allocation9 + $0x410] sm:$0xff]
    %v243 = vld [vmem:[#allocation9 + $0x418] sm:$0xff]
    %v244 = vld [vmem:[#allocation9 + $0x420] sm:$0xff]
    %v245 = vld [vmem:[#allocation9 + $0x428] sm:$0xff]
    %v246 = vld [vmem:[#allocation9 + $0x430] sm:$0xff]
    %v247 = vld [vmem:[#allocation9 + $0x438] sm:$0xff]
    %v248 = vld [vmem:[#allocation9 + $0x440] sm:$0xff]
    %v249 = vld [vmem:[#allocation9 + $0x448] sm:$0xff]
    %v250 = vld [vmem:[#allocation9 + $0x450] sm:$0xff]
    %v251 = vld [vmem:[#allocation9 + $0x458] sm:$0xff]
    %v252 = vld [vmem:[#allocation9 + $0x460] sm:$0xff]
    %v253 = vld [vmem:[#allocation9 + $0x468] sm:$0xff]
    %v254 = vld [vmem:[#allocation9 + $0x470] sm:$0xff]
    %v255 = vld [vmem:[#allocation9 + $0x478] sm:$0xff]
    %v256 = vld [vmem:[#allocation9 + $0x480] sm:$0xff]
    %v257 = vld [vmem:[#allocation9 + $0x488] sm:$0xff]
    %v258 = vld [vmem:[#allocation9 + $0x490] sm:$0xff]
    %v259 = vld [vmem:[#allocation9 + $0x498] sm:$0xff]
    %v260 = vld [vmem:[#allocation9 + $0x4a0] sm:$0xff]
    %v261 = vld [vmem:[#allocation9 + $0x4a8] sm:$0xff]
    %v262 = vld [vmem:[#allocation9 + $0x4b0] sm:$0xff]
    %v263 = vld [vmem:[#allocation9 + $0x4b8] sm:$0xff]
    %v264 = vld [vmem:[#allocation9 + $0x4c0] sm:$0xff]
    %v265 = vld [vmem:[#allocation9 + $0x4c8] sm:$0xff]
    %v266 = vld [vmem:[#allocation9 + $0x4d0] sm:$0xff]
    %v267 = vld [vmem:[#allocation9 + $0x4d8] sm:$0xff]
    %v268 = vld [vmem:[#allocation9 + $0x4e0] sm:$0xff]
    %v269 = vld [vmem:[#allocation9 + $0x4e8] sm:$0xff]
    %v270 = vld [vmem:[#allocation9 + $0x4f0] sm:$0xff]
    %v271 = vld [vmem:[#allocation9 + $0x4f8] sm:$0xff]
    %v272 = vld [vmem:[#allocation9 + $0x500] sm:$0xff]
    %v273 = vld [vmem:[#allocation9 + $0x508] sm:$0xff]
    %v274 = vld [vmem:[#allocation9 + $0x510] sm:$0xff]
    %v275 = vld [vmem:[#allocation9 + $0x518] sm:$0xff]
    %v276 = vld [vmem:[#allocation9 + $0x520] sm:$0xff]
    %v277 = vld [vmem:[#allocation9 + $0x528] sm:$0xff]
    %v278 = vld [vmem:[#allocation9 + $0x530] sm:$0xff]
    %v279 = vld [vmem:[#allocation9 + $0x538] sm:$0xff]
    %v280 = vld [vmem:[#allocation9 + $0x540] sm:$0xff]
    %v281 = vld [vmem:[#allocation9 + $0x548] sm:$0xff]
    %v282 = vld [vmem:[#allocation9 + $0x550] sm:$0xff]
    %v283 = vld [vmem:[#allocation9 + $0x558] sm:$0xff]
    %v284 = vld [vmem:[#allocation9 + $0x560] sm:$0xff]
    %v285 = vld [vmem:[#allocation9 + $0x568] sm:$0xff]
    %v286 = vld [vmem:[#allocation9 + $0x570] sm:$0xff]
    %v287 = vld [vmem:[#allocation9 + $0x578] sm:$0xff]
    %v288 = vld [vmem:[#allocation9 + $0x580] sm:$0xff]
    %v289 = vld [vmem:[#allocation9 + $0x588] sm:$0xff]
    %v290 = vld [vmem:[#allocation9 + $0x590] sm:$0xff]
    %v291 = vld [vmem:[#allocation9 + $0x598] sm:$0xff]
    %v292 = vld [vmem:[#allocation9 + $0x5a0] sm:$0xff]
    %v293 = vld [vmem:[#allocation9 + $0x5a8] sm:$0xff]
    %v294 = vld [vmem:[#allocation9 + $0x5b0] sm:$0xff]
    %v295 = vld [vmem:[#allocation9 + $0x5b8] sm:$0xff]
    %v296 = vld [vmem:[#allocation9 + $0x5c0] sm:$0xff]
    %v297 = vld [vmem:[#allocation9 + $0x5c8] sm:$0xff]
    %v298 = vld [vmem:[#allocation9 + $0x5d0] sm:$0xff]
    %v299 = vld [vmem:[#allocation9 + $0x5d8] sm:$0xff]
    %v300 = vld [vmem:[#allocation9 + $0x5e0] sm:$0xff]
    %v301 = vld [vmem:[#allocation9 + $0x5e8] sm:$0xff]
    %v302 = vld [vmem:[#allocation9 + $0x5f0] sm:$0xff]
    %v303 = vld [vmem:[#allocation9 + $0x5f8] sm:$0xff]
    %v304 = vld [vmem:[#allocation9 + $0x600] sm:$0xff]
    %v305 = vld [vmem:[#allocation9 + $0x608] sm:$0xff]
    %v306 = vld [vmem:[#allocation9 + $0x610] sm:$0xff]
    %v307 = vld [vmem:[#allocation9 + $0x618] sm:$0xff]
    %v308 = vld [vmem:[#allocation9 + $0x620] sm:$0xff]
    %v309 = vld [vmem:[#allocation9 + $0x628] sm:$0xff]
    %v310 = vld [vmem:[#allocation9 + $0x630] sm:$0xff]
    %v311 = vld [vmem:[#allocation9 + $0x638] sm:$0xff]
    %v312 = vld [vmem:[#allocation9 + $0x640] sm:$0xff]
    %v313 = vld [vmem:[#allocation9 + $0x648] sm:$0xff]
    %v314 = vld [vmem:[#allocation9 + $0x650] sm:$0xff]
    %v315 = vld [vmem:[#allocation9 + $0x658] sm:$0xff]
    %v316 = vld [vmem:[#allocation9 + $0x660] sm:$0xff]
    %v317 = vld [vmem:[#allocation9 + $0x668] sm:$0xff]
    %v318 = vld [vmem:[#allocation9 + $0x670] sm:$0xff]
    %v319 = vld [vmem:[#allocation9 + $0x678] sm:$0xff]
    %v320 = vld [vmem:[#allocation9 + $0x680] sm:$0xff]
    %v321 = vld [vmem:[#allocation9 + $0x688] sm:$0xff]
    %v322 = vld [vmem:[#allocation9 + $0x690] sm:$0xff]
    %v323 = vld [vmem:[#allocation9 + $0x698] sm:$0xff]
    %v324 = vld [vmem:[#allocation9 + $0x6a0] sm:$0xff]
    %v325 = vld [vmem:[#allocation9 + $0x6a8] sm:$0xff]
    %v326 = vld [vmem:[#allocation9 + $0x6b0] sm:$0xff]
    %v327 = vld [vmem:[#allocation9 + $0x6b8] sm:$0xff]
    %v328 = vld [vmem:[#allocation9 + $0x6c0] sm:$0xff]
    %v329 = vld [vmem:[#allocation9 + $0x6c8] sm:$0xff]
    %v330 = vld [vmem:[#allocation9 + $0x6d0] sm:$0xff]
    %v331 = vld [vmem:[#allocation9 + $0x6d8] sm:$0xff]
    %v332 = vld [vmem:[#allocation9 + $0x6e0] sm:$0xff]
    %v333 = vld [vmem:[#allocation9 + $0x6e8] sm:$0xff]
    %v334 = vld [vmem:[#allocation9 + $0x6f0] sm:$0xff]
    %v335 = vld [vmem:[#allocation9 + $0x6f8] sm:$0xff]
    %v336 = vld [vmem:[#allocation9 + $0x700] sm:$0xff]
    %v337 = vld [vmem:[#allocation9 + $0x708] sm:$0xff]
    %v338 = vld [vmem:[#allocation9 + $0x710] sm:$0xff]
    %v339 = vld [vmem:[#allocation9 + $0x718] sm:$0xff]
    %v340 = vld [vmem:[#allocation9 + $0x720] sm:$0xff]
    %v341 = vld [vmem:[#allocation9 + $0x728] sm:$0xff]
    %v342 = vld [vmem:[#allocation9 + $0x730] sm:$0xff]
    %v343 = vld [vmem:[#allocation9 + $0x738] sm:$0xff]
    %v344 = vld [vmem:[#allocation9 + $0x740] sm:$0xff]
    %v345 = vld [vmem:[#allocation9 + $0x748] sm:$0xff]
    %v346 = vld [vmem:[#allocation9 + $0x750] sm:$0xff]
    %v347 = vld [vmem:[#allocation9 + $0x758] sm:$0xff]
    %v348 = vld [vmem:[#allocation9 + $0x760] sm:$0xff]
    %v349 = vld [vmem:[#allocation9 + $0x768] sm:$0xff]
    %v350 = vld [vmem:[#allocation9 + $0x770] sm:$0xff]
    %v351 = vld [vmem:[#allocation9 + $0x778] sm:$0xff]
    %v352 = vld [vmem:[#allocation9 + $0x780] sm:$0xff]
    %v353 = vld [vmem:[#allocation9 + $0x788] sm:$0xff]
    %v354 = vld [vmem:[#allocation9 + $0x790] sm:$0xff]
    %v355 = vld [vmem:[#allocation9 + $0x798] sm:$0xff]
    %v356 = vld [vmem:[#allocation9 + $0x7a0] sm:$0xff]
    %v357 = vld [vmem:[#allocation9 + $0x7a8] sm:$0xff]
    %v358 = vld [vmem:[#allocation9 + $0x7b0] sm:$0xff]
    %v359 = vld [vmem:[#allocation9 + $0x7b8] sm:$0xff]
    %v360 = vld [vmem:[#allocation9 + $0x7c0] sm:$0xff]
    %v361 = vld [vmem:[#allocation9 + $0x7c8] sm:$0xff]
    %v362 = vld [vmem:[#allocation9 + $0x7d0] sm:$0xff]
    %v363 = vld [vmem:[#allocation9 + $0x7d8] sm:$0xff]
    %v364 = vld [vmem:[#allocation9 + $0x7e0] sm:$0xff]
    %v365 = vld [vmem:[#allocation9 + $0x7e8] sm:$0xff]
    %v366 = vld [vmem:[#allocation9 + $0x7f0] sm:$0xff]
    %v367 = vld [vmem:[#allocation9 + $0x7f8] sm:$0xff]
    %368 = vmatpush.msra.mxu0 %v127
    %369 = vmatpush.msra.mxu0 %v126
    %370 = vmatpush.msra.mxu0 %v125
    %371 = vmatpush.msra.mxu0 %v124
    %372 = vmatpush.msra.mxu0 %v123
    %373 = vmatpush.msra.mxu0 %v122
    %374 = vmatpush.msra.mxu0 %v121
    %375 = vmatpush.msra.mxu0 %v120
    %376 = vmatpush.msra.mxu0 %v119
    %377 = vmatpush.msra.mxu0 %v118
    %378 = vmatpush.msra.mxu0 %v117
    %379 = vmatpush.msra.mxu0 %v116
    %380 = vmatpush.msra.mxu0 %v115
    %381 = vmatpush.msra.mxu0 %v114
    %382 = vmatpush.msra.mxu0 %v113
    %383 = vmatpush.msra.mxu0 %v112
    %384 = vmatmul.f32.gmra.mxu0 %v96
    %v385 = vpop.f32.mrf.mxu0
    %v386 = vadd.f32 0.0, %v385
    %387 = vdwg.mxu0
    %388 = vmatpush.msra.mxu0 %v143
    %389 = vmatpush.msra.mxu0 %v142
    %390 = vmatpush.msra.mxu0 %v141
    %391 = vmatpush.msra.mxu0 %v140
    %392 = vmatpush.msra.mxu0 %v139
    %393 = vmatpush.msra.mxu0 %v138
    %394 = vmatpush.msra.mxu0 %v137
    %395 = vmatpush.msra.mxu0 %v136
    %396 = vmatpush.msra.mxu0 %v135
    %397 = vmatpush.msra.mxu0 %v134
    %398 = vmatpush.msra.mxu0 %v133
    %399 = vmatpush.msra.mxu0 %v132
    %400 = vmatpush.msra.mxu0 %v131
    %401 = vmatpush.msra.mxu0 %v130
    %402 = vmatpush.msra.mxu0 %v129
    %403 = vmatpush.msra.mxu0 %v128
    %404 = vmatmul.f32.gmra.mxu0 %v97
    %v405 = vpop.f32.mrf.mxu0
    %v406 = vadd.f32 %v386, %v405
    %407 = vdwg.mxu0
    %408 = vmatpush.msra.mxu0 %v159
    %409 = vmatpush.msra.mxu0 %v158
    %410 = vmatpush.msra.mxu0 %v157
    %411 = vmatpush.msra.mxu0 %v156
    %412 = vmatpush.msra.mxu0 %v155
    %413 = vmatpush.msra.mxu0 %v154
    %414 = vmatpush.msra.mxu0 %v153
    %415 = vmatpush.msra.mxu0 %v152
    %416 = vmatpush.msra.mxu0 %v151
    %417 = vmatpush.msra.mxu0 %v150
    %418 = vmatpush.msra.mxu0 %v149
    %419 = vmatpush.msra.mxu0 %v148
    %420 = vmatpush.msra.mxu0 %v147
    %421 = vmatpush.msra.mxu0 %v146
    %422 = vmatpush.msra.mxu0 %v145
    %423 = vmatpush.msra.mxu0 %v144
    %424 = vmatmul.f32.gmra.mxu0 %v98
    %v425 = vpop.f32.mrf.mxu0
    %v426 = vadd.f32 %v406, %v425
    %427 = vdwg.mxu0
    %428 = vmatpush.msra.mxu0 %v175
    %429 = vmatpush.msra.mxu0 %v174
    %430 = vmatpush.msra.mxu0 %v173
    %431 = vmatpush.msra.mxu0 %v172
    %432 = vmatpush.msra.mxu0 %v171
    %433 = vmatpush.msra.mxu0 %v170
    %434 = vmatpush.msra.mxu0 %v169
    %435 = vmatpush.msra.mxu0 %v168
    %436 = vmatpush.msra.mxu0 %v167
    %437 = vmatpush.msra.mxu0 %v166
    %438 = vmatpush.msra.mxu0 %v165
    %439 = vmatpush.msra.mxu0 %v164
    %440 = vmatpush.msra.mxu0 %v163
    %441 = vmatpush.msra.mxu0 %v162
    %442 = vmatpush.msra.mxu0 %v161
    %443 = vmatpush.msra.mxu0 %v160
    %444 = vmatmul.f32.gmra.mxu0 %v99
    %v445 = vpop.f32.mrf.mxu0
    %v446 = vadd.f32 %v426, %v445
    %447 = vdwg.mxu0
    %448 = vmatpush.msra.mxu0 %v191
    %449 = vmatpush.msra.mxu0 %v190
    %450 = vmatpush.msra.mxu0 %v189
    %451 = vmatpush.msra.mxu0 %v188
    %452 = vmatpush.msra.mxu0 %v187
    %453 = vmatpush.msra.mxu0 %v186
    %454 = vmatpush.msra.mxu0 %v185
    %455 = vmatpush.msra.mxu0 %v184
    %456 = vmatpush.msra.mxu0 %v183
    %457 = vmatpush.msra.mxu0 %v182
    %458 = vmatpush.msra.mxu0 %v181
    %459 = vmatpush.msra.mxu0 %v180
    %460 = vmatpush.msra.mxu0 %v179
    %461 = vmatpush.msra.mxu0 %v178
    %462 = vmatpush.msra.mxu0 %v177
    %463 = vmatpush.msra.mxu0 %v176
    %464 = vmatmul.f32.gmra.mxu0 %v100
    %v465 = vpop.f32.mrf.mxu0
    %v466 = vadd.f32 %v446, %v465
    %467 = vdwg.mxu0
    %468 = vmatpush.msra.mxu0 %v207
    %469 = vmatpush.msra.mxu0 %v206
    %470 = vmatpush.msra.mxu0 %v205
    %471 = vmatpush.msra.mxu0 %v204
    %472 = vmatpush.msra.mxu0 %v203
    %473 = vmatpush.msra.mxu0 %v202
    %474 = vmatpush.msra.mxu0 %v201
    %475 = vmatpush.msra.mxu0 %v200
    %476 = vmatpush.msra.mxu0 %v199
    %477 = vmatpush.msra.mxu0 %v198
    %478 = vmatpush.msra.mxu0 %v197
    %479 = vmatpush.msra.mxu0 %v196
    %480 = vmatpush.msra.mxu0 %v195
    %481 = vmatpush.msra.mxu0 %v194
    %482 = vmatpush.msra.mxu0 %v193
    %483 = vmatpush.msra.mxu0 %v192
    %484 = vmatmul.f32.gmra.mxu0 %v101
    %v485 = vpop.f32.mrf.mxu0
    %v486 = vadd.f32 %v466, %v485
    %487 = vdwg.mxu0
    %488 = vmatpush.msra.mxu0 %v223
    %489 = vmatpush.msra.mxu0 %v222
    %490 = vmatpush.msra.mxu0 %v221
    %491 = vmatpush.msra.mxu0 %v220
    %492 = vmatpush.msra.mxu0 %v219
    %493 = vmatpush.msra.mxu0 %v218
    %494 = vmatpush.msra.mxu0 %v217
    %495 = vmatpush.msra.mxu0 %v216
    %496 = vmatpush.msra.mxu0 %v215
    %497 = vmatpush.msra.mxu0 %v214
    %498 = vmatpush.msra.mxu0 %v213
    %499 = vmatpush.msra.mxu0 %v212
    %500 = vmatpush.msra.mxu0 %v211
    %501 = vmatpush.msra.mxu0 %v210
    %502 = vmatpush.msra.mxu0 %v209
    %503 = vmatpush.msra.mxu0 %v208
    %504 = vmatmul.f32.gmra.mxu0 %v102
    %v505 = vpop.f32.mrf.mxu0
    %v506 = vadd.f32 %v486, %v505
    %507 = vdwg.mxu0
    %508 = vmatpush.msra.mxu0 %v239
    %509 = vmatpush.msra.mxu0 %v238
    %510 = vmatpush.msra.mxu0 %v237
    %511 = vmatpush.msra.mxu0 %v236
    %512 = vmatpush.msra.mxu0 %v235
    %513 = vmatpush.msra.mxu0 %v234
    %514 = vmatpush.msra.mxu0 %v233
    %515 = vmatpush.msra.mxu0 %v232
    %516 = vmatpush.msra.mxu0 %v231
    %517 = vmatpush.msra.mxu0 %v230
    %518 = vmatpush.msra.mxu0 %v229
    %519 = vmatpush.msra.mxu0 %v228
    %520 = vmatpush.msra.mxu0 %v227
    %521 = vmatpush.msra.mxu0 %v226
    %522 = vmatpush.msra.mxu0 %v225
    %523 = vmatpush.msra.mxu0 %v224
    %524 = vmatmul.f32.gmra.mxu0 %v103
    %v525 = vpop.f32.mrf.mxu0
    %v526 = vadd.f32 %v506, %v525
    %527 = vdwg.mxu0
    %528 = vmatpush.msra.mxu0 %v255
    %529 = vmatpush.msra.mxu0 %v254
    %530 = vmatpush.msra.mxu0 %v253
    %531 = vmatpush.msra.mxu0 %v252
    %532 = vmatpush.msra.mxu0 %v251
    %533 = vmatpush.msra.mxu0 %v250
    %534 = vmatpush.msra.mxu0 %v249
    %535 = vmatpush.msra.mxu0 %v248
    %536 = vmatpush.msra.mxu0 %v247
    %537 = vmatpush.msra.mxu0 %v246
    %538 = vmatpush.msra.mxu0 %v245
    %539 = vmatpush.msra.mxu0 %v244
    %540 = vmatpush.msra.mxu0 %v243
    %541 = vmatpush.msra.mxu0 %v242
    %542 = vmatpush.msra.mxu0 %v241
    %543 = vmatpush.msra.mxu0 %v240
    %544 = vmatmul.f32.gmra.mxu0 %v104
    %v545 = vpop.f32.mrf.mxu0
    %v546 = vadd.f32 %v526, %v545
    %547 = vdwg.mxu0
    %548 = vmatpush.msra.mxu0 %v271
    %549 = vmatpush.msra.mxu0 %v270
    %550 = vmatpush.msra.mxu0 %v269
    %551 = vmatpush.msra.mxu0 %v268
    %552 = vmatpush.msra.mxu0 %v267
    %553 = vmatpush.msra.mxu0 %v266
    %554 = vmatpush.msra.mxu0 %v265
    %555 = vmatpush.msra.mxu0 %v264
    %556 = vmatpush.msra.mxu0 %v263
    %557 = vmatpush.msra.mxu0 %v262
    %558 = vmatpush.msra.mxu0 %v261
    %559 = vmatpush.msra.mxu0 %v260
    %560 = vmatpush.msra.mxu0 %v259
    %561 = vmatpush.msra.mxu0 %v258
    %562 = vmatpush.msra.mxu0 %v257
    %563 = vmatpush.msra.mxu0 %v256
    %564 = vmatmul.f32.gmra.mxu0 %v105
    %v565 = vpop.f32.mrf.mxu0
    %v566 = vadd.f32 %v546, %v565
    %567 = vdwg.mxu0
    %568 = vmatpush.msra.mxu0 %v287
    %569 = vmatpush.msra.mxu0 %v286
    %570 = vmatpush.msra.mxu0 %v285
    %571 = vmatpush.msra.mxu0 %v284
    %572 = vmatpush.msra.mxu0 %v283
    %573 = vmatpush.msra.mxu0 %v282
    %574 = vmatpush.msra.mxu0 %v281
    %575 = vmatpush.msra.mxu0 %v280
    %576 = vmatpush.msra.mxu0 %v279
    %577 = vmatpush.msra.mxu0 %v278
    %578 = vmatpush.msra.mxu0 %v277
    %579 = vmatpush.msra.mxu0 %v276
    %580 = vmatpush.msra.mxu0 %v275
    %581 = vmatpush.msra.mxu0 %v274
    %582 = vmatpush.msra.mxu0 %v273
    %583 = vmatpush.msra.mxu0 %v272
    %584 = vmatmul.f32.gmra.mxu0 %v106
    %v585 = vpop.f32.mrf.mxu0
    %v586 = vadd.f32 %v566, %v585
    %587 = vdwg.mxu0
    %588 = vmatpush.msra.mxu0 %v303
    %589 = vmatpush.msra.mxu0 %v302
    %590 = vmatpush.msra.mxu0 %v301
    %591 = vmatpush.msra.mxu0 %v300
    %592 = vmatpush.msra.mxu0 %v299
    %593 = vmatpush.msra.mxu0 %v298
    %594 = vmatpush.msra.mxu0 %v297
    %595 = vmatpush.msra.mxu0 %v296
    %596 = vmatpush.msra.mxu0 %v295
    %597 = vmatpush.msra.mxu0 %v294
    %598 = vmatpush.msra.mxu0 %v293
    %599 = vmatpush.msra.mxu0 %v292
    %600 = vmatpush.msra.mxu0 %v291
    %601 = vmatpush.msra.mxu0 %v290
    %602 = vmatpush.msra.mxu0 %v289
    %603 = vmatpush.msra.mxu0 %v288
    %604 = vmatmul.f32.gmra.mxu0 %v107
    %v605 = vpop.f32.mrf.mxu0
    %v606 = vadd.f32 %v586, %v605
    %607 = vdwg.mxu0
    %608 = vmatpush.msra.mxu0 %v319
    %609 = vmatpush.msra.mxu0 %v318
    %610 = vmatpush.msra.mxu0 %v317
    %611 = vmatpush.msra.mxu0 %v316
    %612 = vmatpush.msra.mxu0 %v315
    %613 = vmatpush.msra.mxu0 %v314
    %614 = vmatpush.msra.mxu0 %v313
    %615 = vmatpush.msra.mxu0 %v312
    %616 = vmatpush.msra.mxu0 %v311
    %617 = vmatpush.msra.mxu0 %v310
    %618 = vmatpush.msra.mxu0 %v309
    %619 = vmatpush.msra.mxu0 %v308
    %620 = vmatpush.msra.mxu0 %v307
    %621 = vmatpush.msra.mxu0 %v306
    %622 = vmatpush.msra.mxu0 %v305
    %623 = vmatpush.msra.mxu0 %v304
    %624 = vmatmul.f32.gmra.mxu0 %v108
    %v625 = vpop.f32.mrf.mxu0
    %v626 = vadd.f32 %v606, %v625
    %627 = vdwg.mxu0
    %628 = vmatpush.msra.mxu0 %v335
    %629 = vmatpush.msra.mxu0 %v334
    %630 = vmatpush.msra.mxu0 %v333
    %631 = vmatpush.msra.mxu0 %v332
    %632 = vmatpush.msra.mxu0 %v331
    %633 = vmatpush.msra.mxu0 %v330
    %634 = vmatpush.msra.mxu0 %v329
    %635 = vmatpush.msra.mxu0 %v328
    %636 = vmatpush.msra.mxu0 %v327
    %637 = vmatpush.msra.mxu0 %v326
    %638 = vmatpush.msra.mxu0 %v325
    %639 = vmatpush.msra.mxu0 %v324
    %640 = vmatpush.msra.mxu0 %v323
    %641 = vmatpush.msra.mxu0 %v322
    %642 = vmatpush.msra.mxu0 %v321
    %643 = vmatpush.msra.mxu0 %v320
    %644 = vmatmul.f32.gmra.mxu0 %v109
    %v645 = vpop.f32.mrf.mxu0
    %v646 = vadd.f32 %v626, %v645
    %647 = vdwg.mxu0
    %648 = vmatpush.msra.mxu0 %v351
    %649 = vmatpush.msra.mxu0 %v350
    %650 = vmatpush.msra.mxu0 %v349
    %651 = vmatpush.msra.mxu0 %v348
    %652 = vmatpush.msra.mxu0 %v347
    %653 = vmatpush.msra.mxu0 %v346
    %654 = vmatpush.msra.mxu0 %v345
    %655 = vmatpush.msra.mxu0 %v344
    %656 = vmatpush.msra.mxu0 %v343
    %657 = vmatpush.msra.mxu0 %v342
    %658 = vmatpush.msra.mxu0 %v341
    %659 = vmatpush.msra.mxu0 %v340
    %660 = vmatpush.msra.mxu0 %v339
    %661 = vmatpush.msra.mxu0 %v338
    %662 = vmatpush.msra.mxu0 %v337
    %663 = vmatpush.msra.mxu0 %v336
    %664 = vmatmul.f32.gmra.mxu0 %v110
    %v665 = vpop.f32.mrf.mxu0
    %v666 = vadd.f32 %v646, %v665
    %667 = vdwg.mxu0
    %668 = vmatpush.msra.mxu0 %v367
    %669 = vmatpush.msra.mxu0 %v366
    %670 = vmatpush.msra.mxu0 %v365
    %671 = vmatpush.msra.mxu0 %v364
    %672 = vmatpush.msra.mxu0 %v363
    %673 = vmatpush.msra.mxu0 %v362
    %674 = vmatpush.msra.mxu0 %v361
    %675 = vmatpush.msra.mxu0 %v360
    %676 = vmatpush.msra.mxu0 %v359
    %677 = vmatpush.msra.mxu0 %v358
    %678 = vmatpush.msra.mxu0 %v357
    %679 = vmatpush.msra.mxu0 %v356
    %680 = vmatpush.msra.mxu0 %v355
    %681 = vmatpush.msra.mxu0 %v354
    %682 = vmatpush.msra.mxu0 %v353
    %683 = vmatpush.msra.mxu0 %v352
    %684 = vmatmul.f32.gmra.mxu0 %v111
    %v685 = vpop.f32.mrf.mxu0
    %v686 = vadd.f32 %v666, %v685
    %687 = vdwg.mxu0
    %v688 = vld [vmem:[#allocation7] sm:$0xff]
    %v689 = vld [vmem:[#allocation7 + $0x8] sm:$0xff]
    %v690 = vld [vmem:[#allocation7 + $0x10] sm:$0xff]
    %v691 = vld [vmem:[#allocation7 + $0x18] sm:$0xff]
    %v692 = vld [vmem:[#allocation7 + $0x20] sm:$0xff]
    %v693 = vld [vmem:[#allocation7 + $0x28] sm:$0xff]
    %v694 = vld [vmem:[#allocation7 + $0x30] sm:$0xff]
    %v695 = vld [vmem:[#allocation7 + $0x38] sm:$0xff]
    %v696 = vld [vmem:[#allocation10] sm:$0xff]
    %v697 = vld [vmem:[#allocation10 + $0x8] sm:$0xff]
    %v698 = vld [vmem:[#allocation10 + $0x10] sm:$0xff]
    %v699 = vld [vmem:[#allocation10 + $0x18] sm:$0xff]
    %v700 = vld [vmem:[#allocation10 + $0x20] sm:$0xff]
    %v701 = vld [vmem:[#allocation10 + $0x28] sm:$0xff]
    %v702 = vld [vmem:[#allocation10 + $0x30] sm:$0xff]
    %v703 = vld [vmem:[#allocation10 + $0x38] sm:$0xff]
    %v704 = vld [vmem:[#allocation10 + $0x40] sm:$0xff]
    %v705 = vld [vmem:[#allocation10 + $0x48] sm:$0xff]
    %v706 = vld [vmem:[#allocation10 + $0x50] sm:$0xff]
    %v707 = vld [vmem:[#allocation10 + $0x58] sm:$0xff]
    %v708 = vld [vmem:[#allocation10 + $0x60] sm:$0xff]
    %v709 = vld [vmem:[#allocation10 + $0x68] sm:$0xff]
    %v710 = vld [vmem:[#allocation10 + $0x70] sm:$0xff]
    %v711 = vld [vmem:[#allocation10 + $0x78] sm:$0xff]
    %v712 = vld [vmem:[#allocation10 + $0x80] sm:$0xff]
    %v713 = vld [vmem:[#allocation10 + $0x88] sm:$0xff]
    %v714 = vld [vmem:[#allocation10 + $0x90] sm:$0xff]
    %v715 = vld [vmem:[#allocation10 + $0x98] sm:$0xff]
    %v716 = vld [vmem:[#allocation10 + $0xa0] sm:$0xff]
    %v717 = vld [vmem:[#allocation10 + $0xa8] sm:$0xff]
    %v718 = vld [vmem:[#allocation10 + $0xb0] sm:$0xff]
    %v719 = vld [vmem:[#allocation10 + $0xb8] sm:$0xff]
    %v720 = vld [vmem:[#allocation10 + $0xc0] sm:$0xff]
    %v721 = vld [vmem:[#allocation10 + $0xc8] sm:$0xff]
    %v722 = vld [vmem:[#allocation10 + $0xd0] sm:$0xff]
    %v723 = vld [vmem:[#allocation10 + $0xd8] sm:$0xff]
    %v724 = vld [vmem:[#allocation10 + $0xe0] sm:$0xff]
    %v725 = vld [vmem:[#allocation10 + $0xe8] sm:$0xff]
    %v726 = vld [vmem:[#allocation10 + $0xf0] sm:$0xff]
    %v727 = vld [vmem:[#allocation10 + $0xf8] sm:$0xff]
    %v728 = vld [vmem:[#allocation10 + $0x100] sm:$0xff]
    %v729 = vld [vmem:[#allocation10 + $0x108] sm:$0xff]
    %v730 = vld [vmem:[#allocation10 + $0x110] sm:$0xff]
    %v731 = vld [vmem:[#allocation10 + $0x118] sm:$0xff]
    %v732 = vld [vmem:[#allocation10 + $0x120] sm:$0xff]
    %v733 = vld [vmem:[#allocation10 + $0x128] sm:$0xff]
    %v734 = vld [vmem:[#allocation10 + $0x130] sm:$0xff]
    %v735 = vld [vmem:[#allocation10 + $0x138] sm:$0xff]
    %v736 = vld [vmem:[#allocation10 + $0x140] sm:$0xff]
    %v737 = vld [vmem:[#allocation10 + $0x148] sm:$0xff]
    %v738 = vld [vmem:[#allocation10 + $0x150] sm:$0xff]
    %v739 = vld [vmem:[#allocation10 + $0x158] sm:$0xff]
    %v740 = vld [vmem:[#allocation10 + $0x160] sm:$0xff]
    %v741 = vld [vmem:[#allocation10 + $0x168] sm:$0xff]
    %v742 = vld [vmem:[#allocation10 + $0x170] sm:$0xff]
    %v743 = vld [vmem:[#allocation10 + $0x178] sm:$0xff]
    %v744 = vld [vmem:[#allocation10 + $0x180] sm:$0xff]
    %v745 = vld [vmem:[#allocation10 + $0x188] sm:$0xff]
    %v746 = vld [vmem:[#allocation10 + $0x190] sm:$0xff]
    %v747 = vld [vmem:[#allocation10 + $0x198] sm:$0xff]
    %v748 = vld [vmem:[#allocation10 + $0x1a0] sm:$0xff]
    %v749 = vld [vmem:[#allocation10 + $0x1a8] sm:$0xff]
    %v750 = vld [vmem:[#allocation10 + $0x1b0] sm:$0xff]
    %v751 = vld [vmem:[#allocation10 + $0x1b8] sm:$0xff]
    %v752 = vld [vmem:[#allocation10 + $0x1c0] sm:$0xff]
    %v753 = vld [vmem:[#allocation10 + $0x1c8] sm:$0xff]
    %v754 = vld [vmem:[#allocation10 + $0x1d0] sm:$0xff]
    %v755 = vld [vmem:[#allocation10 + $0x1d8] sm:$0xff]
    %v756 = vld [vmem:[#allocation10 + $0x1e0] sm:$0xff]
    %v757 = vld [vmem:[#allocation10 + $0x1e8] sm:$0xff]
    %v758 = vld [vmem:[#allocation10 + $0x1f0] sm:$0xff]
    %v759 = vld [vmem:[#allocation10 + $0x1f8] sm:$0xff]
    %v760 = vld [vmem:[#allocation10 + $0x200] sm:$0xff]
    %v761 = vld [vmem:[#allocation10 + $0x208] sm:$0xff]
    %v762 = vld [vmem:[#allocation10 + $0x210] sm:$0xff]
    %v763 = vld [vmem:[#allocation10 + $0x218] sm:$0xff]
    %v764 = vld [vmem:[#allocation10 + $0x220] sm:$0xff]
    %v765 = vld [vmem:[#allocation10 + $0x228] sm:$0xff]
    %v766 = vld [vmem:[#allocation10 + $0x230] sm:$0xff]
    %v767 = vld [vmem:[#allocation10 + $0x238] sm:$0xff]
    %v768 = vld [vmem:[#allocation10 + $0x240] sm:$0xff]
    %v769 = vld [vmem:[#allocation10 + $0x248] sm:$0xff]
    %v770 = vld [vmem:[#allocation10 + $0x250] sm:$0xff]
    %v771 = vld [vmem:[#allocation10 + $0x258] sm:$0xff]
    %v772 = vld [vmem:[#allocation10 + $0x260] sm:$0xff]
    %v773 = vld [vmem:[#allocation10 + $0x268] sm:$0xff]
    %v774 = vld [vmem:[#allocation10 + $0x270] sm:$0xff]
    %v775 = vld [vmem:[#allocation10 + $0x278] sm:$0xff]
    %v776 = vld [vmem:[#allocation10 + $0x280] sm:$0xff]
    %v777 = vld [vmem:[#allocation10 + $0x288] sm:$0xff]
    %v778 = vld [vmem:[#allocation10 + $0x290] sm:$0xff]
    %v779 = vld [vmem:[#allocation10 + $0x298] sm:$0xff]
    %v780 = vld [vmem:[#allocation10 + $0x2a0] sm:$0xff]
    %v781 = vld [vmem:[#allocation10 + $0x2a8] sm:$0xff]
    %v782 = vld [vmem:[#allocation10 + $0x2b0] sm:$0xff]
    %v783 = vld [vmem:[#allocation10 + $0x2b8] sm:$0xff]
    %v784 = vld [vmem:[#allocation10 + $0x2c0] sm:$0xff]
    %v785 = vld [vmem:[#allocation10 + $0x2c8] sm:$0xff]
    %v786 = vld [vmem:[#allocation10 + $0x2d0] sm:$0xff]
    %v787 = vld [vmem:[#allocation10 + $0x2d8] sm:$0xff]
    %v788 = vld [vmem:[#allocation10 + $0x2e0] sm:$0xff]
    %v789 = vld [vmem:[#allocation10 + $0x2e8] sm:$0xff]
    %v790 = vld [vmem:[#allocation10 + $0x2f0] sm:$0xff]
    %v791 = vld [vmem:[#allocation10 + $0x2f8] sm:$0xff]
    %v792 = vld [vmem:[#allocation10 + $0x300] sm:$0xff]
    %v793 = vld [vmem:[#allocation10 + $0x308] sm:$0xff]
    %v794 = vld [vmem:[#allocation10 + $0x310] sm:$0xff]
    %v795 = vld [vmem:[#allocation10 + $0x318] sm:$0xff]
    %v796 = vld [vmem:[#allocation10 + $0x320] sm:$0xff]
    %v797 = vld [vmem:[#allocation10 + $0x328] sm:$0xff]
    %v798 = vld [vmem:[#allocation10 + $0x330] sm:$0xff]
    %v799 = vld [vmem:[#allocation10 + $0x338] sm:$0xff]
    %v800 = vld [vmem:[#allocation10 + $0x340] sm:$0xff]
    %v801 = vld [vmem:[#allocation10 + $0x348] sm:$0xff]
    %v802 = vld [vmem:[#allocation10 + $0x350] sm:$0xff]
    %v803 = vld [vmem:[#allocation10 + $0x358] sm:$0xff]
    %v804 = vld [vmem:[#allocation10 + $0x360] sm:$0xff]
    %v805 = vld [vmem:[#allocation10 + $0x368] sm:$0xff]
    %v806 = vld [vmem:[#allocation10 + $0x370] sm:$0xff]
    %v807 = vld [vmem:[#allocation10 + $0x378] sm:$0xff]
    %v808 = vld [vmem:[#allocation10 + $0x380] sm:$0xff]
    %v809 = vld [vmem:[#allocation10 + $0x388] sm:$0xff]
    %v810 = vld [vmem:[#allocation10 + $0x390] sm:$0xff]
    %v811 = vld [vmem:[#allocation10 + $0x398] sm:$0xff]
    %v812 = vld [vmem:[#allocation10 + $0x3a0] sm:$0xff]
    %v813 = vld [vmem:[#allocation10 + $0x3a8] sm:$0xff]
    %v814 = vld [vmem:[#allocation10 + $0x3b0] sm:$0xff]
    %v815 = vld [vmem:[#allocation10 + $0x3b8] sm:$0xff]
    %v816 = vld [vmem:[#allocation10 + $0x3c0] sm:$0xff]
    %v817 = vld [vmem:[#allocation10 + $0x3c8] sm:$0xff]
    %v818 = vld [vmem:[#allocation10 + $0x3d0] sm:$0xff]
    %v819 = vld [vmem:[#allocation10 + $0x3d8] sm:$0xff]
    %v820 = vld [vmem:[#allocation10 + $0x3e0] sm:$0xff]
    %v821 = vld [vmem:[#allocation10 + $0x3e8] sm:$0xff]
    %v822 = vld [vmem:[#allocation10 + $0x3f0] sm:$0xff]
    %v823 = vld [vmem:[#allocation10 + $0x3f8] sm:$0xff]
    %824 = vmatpush.msra.mxu0 %v711
    %825 = vmatpush.msra.mxu0 %v710
    %826 = vmatpush.msra.mxu0 %v709
    %827 = vmatpush.msra.mxu0 %v708
    %828 = vmatpush.msra.mxu0 %v707
    %829 = vmatpush.msra.mxu0 %v706
    %830 = vmatpush.msra.mxu0 %v705
    %831 = vmatpush.msra.mxu0 %v704
    %832 = vmatpush.msra.mxu0 %v703
    %833 = vmatpush.msra.mxu0 %v702
    %834 = vmatpush.msra.mxu0 %v701
    %835 = vmatpush.msra.mxu0 %v700
    %836 = vmatpush.msra.mxu0 %v699
    %837 = vmatpush.msra.mxu0 %v698
    %838 = vmatpush.msra.mxu0 %v697
    %839 = vmatpush.msra.mxu0 %v696
    %840 = vmatmul.f32.gmra.mxu0 %v688
    %v841 = vpop.f32.mrf.mxu0
    %v842 = vadd.f32 0.0, %v841
    %843 = vdwg.mxu0
    %844 = vmatpush.msra.mxu0 %v727
    %845 = vmatpush.msra.mxu0 %v726
    %846 = vmatpush.msra.mxu0 %v725
    %847 = vmatpush.msra.mxu0 %v724
    %848 = vmatpush.msra.mxu0 %v723
    %849 = vmatpush.msra.mxu0 %v722
    %850 = vmatpush.msra.mxu0 %v721
    %851 = vmatpush.msra.mxu0 %v720
    %852 = vmatpush.msra.mxu0 %v719
    %853 = vmatpush.msra.mxu0 %v718
    %854 = vmatpush.msra.mxu0 %v717
    %855 = vmatpush.msra.mxu0 %v716
    %856 = vmatpush.msra.mxu0 %v715
    %857 = vmatpush.msra.mxu0 %v714
    %858 = vmatpush.msra.mxu0 %v713
    %859 = vmatpush.msra.mxu0 %v712
    %860 = vmatmul.f32.gmra.mxu0 %v689
    %v861 = vpop.f32.mrf.mxu0
    %v862 = vadd.f32 %v842, %v861
    %863 = vdwg.mxu0
    %864 = vmatpush.msra.mxu0 %v743
    %865 = vmatpush.msra.mxu0 %v742
    %866 = vmatpush.msra.mxu0 %v741
    %867 = vmatpush.msra.mxu0 %v740
    %868 = vmatpush.msra.mxu0 %v739
    %869 = vmatpush.msra.mxu0 %v738
    %870 = vmatpush.msra.mxu0 %v737
    %871 = vmatpush.msra.mxu0 %v736
    %872 = vmatpush.msra.mxu0 %v735
    %873 = vmatpush.msra.mxu0 %v734
    %874 = vmatpush.msra.mxu0 %v733
    %875 = vmatpush.msra.mxu0 %v732
    %876 = vmatpush.msra.mxu0 %v731
    %877 = vmatpush.msra.mxu0 %v730
    %878 = vmatpush.msra.mxu0 %v729
    %879 = vmatpush.msra.mxu0 %v728
    %880 = vmatmul.f32.gmra.mxu0 %v690
    %v881 = vpop.f32.mrf.mxu0
    %v882 = vadd.f32 %v862, %v881
    %883 = vdwg.mxu0
    %884 = vmatpush.msra.mxu0 %v759
    %885 = vmatpush.msra.mxu0 %v758
    %886 = vmatpush.msra.mxu0 %v757
    %887 = vmatpush.msra.mxu0 %v756
    %888 = vmatpush.msra.mxu0 %v755
    %889 = vmatpush.msra.mxu0 %v754
    %890 = vmatpush.msra.mxu0 %v753
    %891 = vmatpush.msra.mxu0 %v752
    %892 = vmatpush.msra.mxu0 %v751
    %893 = vmatpush.msra.mxu0 %v750
    %894 = vmatpush.msra.mxu0 %v749
    %895 = vmatpush.msra.mxu0 %v748
    %896 = vmatpush.msra.mxu0 %v747
    %897 = vmatpush.msra.mxu0 %v746
    %898 = vmatpush.msra.mxu0 %v745
    %899 = vmatpush.msra.mxu0 %v744
    %900 = vmatmul.f32.gmra.mxu0 %v691
    %v901 = vpop.f32.mrf.mxu0
    %v902 = vadd.f32 %v882, %v901
    %903 = vdwg.mxu0
    %904 = vmatpush.msra.mxu0 %v775
    %905 = vmatpush.msra.mxu0 %v774
    %906 = vmatpush.msra.mxu0 %v773
    %907 = vmatpush.msra.mxu0 %v772
    %908 = vmatpush.msra.mxu0 %v771
    %909 = vmatpush.msra.mxu0 %v770
    %910 = vmatpush.msra.mxu0 %v769
    %911 = vmatpush.msra.mxu0 %v768
    %912 = vmatpush.msra.mxu0 %v767
    %913 = vmatpush.msra.mxu0 %v766
    %914 = vmatpush.msra.mxu0 %v765
    %915 = vmatpush.msra.mxu0 %v764
    %916 = vmatpush.msra.mxu0 %v763
    %917 = vmatpush.msra.mxu0 %v762
    %918 = vmatpush.msra.mxu0 %v761
    %919 = vmatpush.msra.mxu0 %v760
    %920 = vmatmul.f32.gmra.mxu0 %v692
    %v921 = vpop.f32.mrf.mxu0
    %v922 = vadd.f32 %v902, %v921
    %923 = vdwg.mxu0
    %924 = vmatpush.msra.mxu0 %v791
    %925 = vmatpush.msra.mxu0 %v790
    %926 = vmatpush.msra.mxu0 %v789
    %927 = vmatpush.msra.mxu0 %v788
    %928 = vmatpush.msra.mxu0 %v787
    %929 = vmatpush.msra.mxu0 %v786
    %930 = vmatpush.msra.mxu0 %v785
    %931 = vmatpush.msra.mxu0 %v784
    %932 = vmatpush.msra.mxu0 %v783
    %933 = vmatpush.msra.mxu0 %v782
    %934 = vmatpush.msra.mxu0 %v781
    %935 = vmatpush.msra.mxu0 %v780
    %936 = vmatpush.msra.mxu0 %v779
    %937 = vmatpush.msra.mxu0 %v778
    %938 = vmatpush.msra.mxu0 %v777
    %939 = vmatpush.msra.mxu0 %v776
    %940 = vmatmul.f32.gmra.mxu0 %v693
    %v941 = vpop.f32.mrf.mxu0
    %v942 = vadd.f32 %v922, %v941
    %943 = vdwg.mxu0
    %944 = vmatpush.msra.mxu0 %v807
    %945 = vmatpush.msra.mxu0 %v806
    %946 = vmatpush.msra.mxu0 %v805
    %947 = vmatpush.msra.mxu0 %v804
    %948 = vmatpush.msra.mxu0 %v803
    %949 = vmatpush.msra.mxu0 %v802
    %950 = vmatpush.msra.mxu0 %v801
    %951 = vmatpush.msra.mxu0 %v800
    %952 = vmatpush.msra.mxu0 %v799
    %953 = vmatpush.msra.mxu0 %v798
    %954 = vmatpush.msra.mxu0 %v797
    %955 = vmatpush.msra.mxu0 %v796
    %956 = vmatpush.msra.mxu0 %v795
    %957 = vmatpush.msra.mxu0 %v794
    %958 = vmatpush.msra.mxu0 %v793
    %959 = vmatpush.msra.mxu0 %v792
    %960 = vmatmul.f32.gmra.mxu0 %v694
    %v961 = vpop.f32.mrf.mxu0
    %v962 = vadd.f32 %v942, %v961
    %963 = vdwg.mxu0
    %964 = vmatpush.msra.mxu0 %v823
    %965 = vmatpush.msra.mxu0 %v822
    %966 = vmatpush.msra.mxu0 %v821
    %967 = vmatpush.msra.mxu0 %v820
    %968 = vmatpush.msra.mxu0 %v819
    %969 = vmatpush.msra.mxu0 %v818
    %970 = vmatpush.msra.mxu0 %v817
    %971 = vmatpush.msra.mxu0 %v816
    %972 = vmatpush.msra.mxu0 %v815
    %973 = vmatpush.msra.mxu0 %v814
    %974 = vmatpush.msra.mxu0 %v813
    %975 = vmatpush.msra.mxu0 %v812
    %976 = vmatpush.msra.mxu0 %v811
    %977 = vmatpush.msra.mxu0 %v810
    %978 = vmatpush.msra.mxu0 %v809
    %979 = vmatpush.msra.mxu0 %v808
    %980 = vmatmul.f32.gmra.mxu0 %v695
    %v981 = vpop.f32.mrf.mxu0
    %v982 = vadd.f32 %v962, %v981
    %983 = vdwg.mxu0
    %v984 = vstv %s93
    %v985 = vmul.f32 %v984, %v686
    %v986 = vstv %s94
    %v987 = vmul.f32 %v986, %v982
    %v988 = vadd.f32 %v985, %v987
    %v989 = vstv %s95
    %v990 = vadd.f32 %v988, %v989
    %991 = vst [vmem:[#allocation12] sm:$0xff] %v990
    // Predicated region
    $region42: #{tpu_custom_call.1} parent=1 // pred_check
      _
    $region43: #{tpu_custom_call.1} parent=1 // pred_check_branch
      %993 = sbr.rel (0) target = $region45
    $region44: #{tpu_custom_call.1} parent=1 // pred_region
      %995 = vsyncadd [#allocation4], 0
      %s997 = sshll.u32 [#allocation12], 4
      %s998 = int_to_ptr.vmem [resolvable:$true] %s997
      %s999 = sshll.u32 %s5, 4
      %s1000 = int_to_ptr.hbm [resolvable:$true] %s999
      %1002 = dma.vmem_to_hbm [thread:$0]  %s998, 128, %s1000, [#allocation4]
    $region45: #{tpu_custom_call.1} parent=1 // pred_fallthru
      _
    // Predicated region
    $region46: #{tpu_custom_call.1} parent=1 // pred_check
      _
    $region47: #{tpu_custom_call.1} parent=1 // pred_check_branch
      %1004 = sbr.rel (0) target = $region49
    $region48: #{tpu_custom_call.1} parent=1 // pred_region
      %1006 = dma.done [#allocation4], 128
    $region49: #{tpu_custom_call.1} parent=1 // pred_fallthru
      _
    %1007 = vsyncpa [#allocation3], 1
    %1008 = vsyncpa [#allocation8], 1
    %1009 = vsyncpa [#allocation11], 1
    %1010 = vsyncpa [#allocation4], 1
    %1011 = vsyncpa [#allocation5], 1

</llo_original>
